<compile_context>
chip_gen: v6e
topology: v6e:2x2x1
jax: 0.10.0
libtpu: 0.0.40
codegen_flags: <defaults>
</compile_context>

<pallas_src>
import jax
import jax.numpy as jnp
from jax.experimental import pallas as pl
from jax.experimental.pallas import tpu as pltpu

_LANE = 128
_SUBLANE = 8
_RESIDENT_VMEM_BUDGET = 40 << 20   # conservative: v7x has 64 MiB physical VMEM
_ONEHOT_MAX_VOCAB_PAD = 4096       # above this, switch to the DMA-gather path
_MIN_SPLIT_ROWS = 512              # only split a single tile if each half >= this
_GATHER_DMA_SLOTS = 8              # per-row copies kept in flight (gather path)


def _round_up(x, m):
    return (x + m - 1) // m * m


# ---------------------------------------------------------------------------
# Path 1: small vocab.  Table resident in VMEM; gather = onehot(ids) @ table on
# the MXU (frees scalar / vld / vst slots; output store is lane-dense).
# ---------------------------------------------------------------------------
def _onehot_kernel(ids_ref, table_ref, out_ref):
    """ids_ref: (TB, 1) int32 | table_ref: (Vp, D) | out_ref: (TB, D)."""
    tb = out_ref.shape[0]
    vp = table_ref.shape[0]
    ids = ids_ref[...]                                        # (TB, 1) int32
    iota = jax.lax.broadcasted_iota(jnp.int32, (tb, vp), 1)   # (TB, Vp)
    # Cast to the table dtype so a bf16 table stays a single native MXU pass.
    onehot = (ids == iota).astype(table_ref.dtype)            # (TB, Vp)
    out_ref[...] = jnp.dot(
        onehot, table_ref[...], preferred_element_type=jnp.float32
    ).astype(out_ref.dtype)


def _onehot_vmem_bytes(tb, vp, d, dsize):
    """Conservative VMEM footprint estimate for the one-hot path."""
    table = 2 * vp * d * dsize          # constant-index input, still double-buffered
    out = 2 * tb * d * dsize            # double-buffered output blocks
    ids = 2 * tb * _LANE * 4            # (tb, 1) int32 block is lane-padded to 128
    temps = tb * vp * (4 + dsize) + tb * d * 4   # iota/compare + onehot + f32 acc
    return table + out + ids + temps


def _onehot_call(ids2d, table_p, tb, n_blocks, *, vmem_limit):
    vp, d = table_p.shape
    t_pad = n_blocks * tb
    return pl.pallas_call(
        _onehot_kernel,
        out_shape=jax.ShapeDtypeStruct((t_pad, d), table_p.dtype),
        grid=(n_blocks,),
        in_specs=[
            pl.BlockSpec((tb, 1), lambda i: (i, 0)),     # ids tile
            pl.BlockSpec((vp, d), lambda i: (0, 0)),     # table (constant index)
        ],
        out_specs=pl.BlockSpec((tb, d), lambda i: (i, 0)),
        compiler_params=pltpu.CompilerParams(
            dimension_semantics=("parallel",),
            vmem_limit_bytes=int(vmem_limit)),
    )(ids2d, table_p)


# ---------------------------------------------------------------------------
# Path 2: large vocab.  Table stays in HBM; per-token row DMAs with several
# copies in flight, driven by scalar-prefetched ids in SMEM.
# ---------------------------------------------------------------------------
def _gather_kernel(ids_ref, table_ref, out_ref, gbuf, sem):
    """ids_ref: SMEM (T_pad,) int32 | table_ref: HBM (V, D) | out_ref: (TB, D)."""
    tb, _ = out_ref.shape
    nslots = sem.shape[0]
    base = pl.program_id(0) * tb

    def start(r):
        row = ids_ref[base + r]
        pltpu.make_async_copy(
            table_ref.at[pl.ds(row, 1)], gbuf.at[pl.ds(r, 1)], sem.at[r % nslots]
        ).start()

    nprime = min(nslots, tb)

    @pl.loop(0, nprime)
    def _(r):
        start(r)

    @pl.loop(0, tb)
    def _(r):
        # Wait on this slot's outstanding row copy (same transfer shape).
        pltpu.make_async_copy(
            table_ref.at[pl.ds(0, 1)], gbuf.at[pl.ds(r, 1)], sem.at[r % nslots]
        ).wait()

        @pl.when(r + nslots < tb)
        def _():
            start(r + nslots)

    out_ref[...] = gbuf[...]


def _gather_call(ids_flat, table, tb, n_blocks, *, vmem_limit):
    v, d = table.shape
    t_pad = n_blocks * tb
    grid_spec = pltpu.PrefetchScalarGridSpec(
        num_scalar_prefetch=1,
        grid=(n_blocks,),
        in_specs=[pl.BlockSpec(memory_space=pl.ANY)],          # table in HBM
        out_specs=pl.BlockSpec((tb, d), lambda i, ids: (i, 0)),
        scratch_shapes=[
            pltpu.VMEM((tb, d), table.dtype),
            pltpu.SemaphoreType.DMA((_GATHER_DMA_SLOTS,)),
        ],
    )
    return pl.pallas_call(
        _gather_kernel,
        out_shape=jax.ShapeDtypeStruct((t_pad, d), table.dtype),
        grid_spec=grid_spec,
        compiler_params=pltpu.CompilerParams(
            dimension_semantics=("parallel",),
            vmem_limit_bytes=int(vmem_limit)),
    )(ids_flat, table)


# ---------------------------------------------------------------------------
# Wrapper: tiling choice, VMEM budget, path dispatch.
# ---------------------------------------------------------------------------
def embedding_forward(ids, table, *, token_block=2048, force_path=None):
    """Pallas equivalent of torch.nn.Embedding(V, D)(ids) -> (B, S, D)."""
    B, S = ids.shape
    V, D = table.shape
    T = B * S
    dsize = jnp.dtype(table.dtype).itemsize
    Vp = _round_up(V, _LANE)

    # ---- token tile size -------------------------------------------------
    T8 = _round_up(T, _SUBLANE)
    tb = min(_round_up(token_block, _SUBLANE), T8)
    # v7x: keep >= 2 blocks when there is enough work, so ("parallel",) can
    # shard the grid across both TensorCores; neutral on single-TC v5e/v6e.
    if tb == T8 and T8 >= 2 * _MIN_SPLIT_ROWS:
        tb = _round_up(pl.cdiv(T8, 2), _SUBLANE)

    # ---- path dispatch ----------------------------------------------------
    if force_path is None:
        use_onehot = Vp <= _ONEHOT_MAX_VOCAB_PAD
    else:
        use_onehot = force_path == "onehot"

    if use_onehot:
        # Shrink the token tile until the resident-table footprint fits.
        while tb > 64 and _onehot_vmem_bytes(tb, Vp, D, dsize) > _RESIDENT_VMEM_BUDGET:
            tb = max(64, _round_up(tb // 2, _SUBLANE))
        if force_path is None and (
                _onehot_vmem_bytes(tb, Vp, D, dsize) > _RESIDENT_VMEM_BUDGET):
            use_onehot = False   # table too big to keep resident (esp. v7x)

    n_blocks = pl.cdiv(T8, tb)
    T_pad = n_blocks * tb

    flat = ids.reshape(T).astype(jnp.int32)
    if T_pad != T:
        flat = jnp.pad(flat, (0, T_pad - T))

    if use_onehot:
        # Pad the vocab dim to a multiple of 128 with zero rows so the one-hot
        # lane dim and the MXU contraction are dense.
        # TODO(synk): in a production module, pad the table once at init instead
        # of per forward call.
        table_p = table if Vp == V else jnp.pad(table, ((0, Vp - V), (0, 0)))
        need = _onehot_vmem_bytes(tb, Vp, D, dsize)
        vmem_limit = min(_RESIDENT_VMEM_BUDGET + (8 << 20),
                         max(need + (4 << 20), 16 << 20))
        out = _onehot_call(flat.reshape(T_pad, 1), table_p, tb, n_blocks,
                           vmem_limit=vmem_limit)
    else:
        # Large-vocab path: clamp ids so the per-row HBM DMA can never go OOB
        # (torch.nn.Embedding would raise on out-of-range ids).
        flat = jnp.clip(flat, 0, V - 1)
        need = 3 * tb * D * dsize                   # 2x out blocks + gather scratch
        vmem_limit = max(need + (4 << 20), 16 << 20)
        out = _gather_call(flat, table, tb, n_blocks, vmem_limit=vmem_limit)

    if T_pad != T:                        # only pay the slice when padding exists
        out = out[:T]
    return out.reshape(B, S, D)


if __name__ == "__main__":
    key = jax.random.PRNGKey(0)
    k_tab, k_ids = jax.random.split(key)

    # Small shapes consistent with the module: vocab=64, dim=128, batch=2, seq=8.
    VOCAB, DIM = 64, 128
    B, S = 2, 8

    # Deterministic "embedder.vectors" stand-in (synthetic weights).
    table = jax.random.normal(k_tab, (VOCAB, DIM), dtype=jnp.float32)
    ids = jax.random.randint(k_ids, (B, S), 0, VOCAB, dtype=jnp.int32)

    # Reference: plain JAX gather (== torch.nn.Embedding forward).
    ref = table[ids]

    # Path 1: VMEM-resident table + one-hot MXU gather (auto-dispatched at V=64).
    out = jax.block_until_ready(embedding_forward(ids, table))
    assert out.shape == (B, S, DIM)
    assert out.dtype == jnp.float32
    # Tolerance covers the MXU's reduced-precision f32 matmul path; a wrong-row
    # selection would produce O(1) errors and still fail this check.
    assert jnp.allclose(out, ref, rtol=1e-2, atol=1e-2), \
        "one-hot path mismatch vs reference embedding lookup"

    # Path 2: HBM table + per-row DMA gather (the large-vocab path), forced at
    # small shapes so it is exercised too.  Row copies are exact.
    out_g = jax.block_until_ready(embedding_forward(ids, table, force_path="gather"))
    assert out_g.shape == (B, S, DIM)
    assert jnp.array_equal(out_g, ref), \
        "gather path mismatch vs reference embedding lookup"

    print("KERNEL_OK")
</pallas_src>

<mosaic_0001>
module attributes {stable_mosaic.version = 11 : i64} {
  func.func @_onehot_kernel(%arg0: i32, %arg1: memref<16x1xi32, #tpu.memory_space<vmem>>, %arg2: memref<128x128xf32, #tpu.memory_space<vmem>>, %arg3: memref<16x128xf32, #tpu.memory_space<vmem>>) attributes {dimension_semantics = [#tpu.dimension_semantics<parallel>], iteration_bounds = array<i64: 1>, scalar_prefetch = 0 : i64, scratch_operands = 0 : i64, tpu.core_type = #tpu.core_type<tc>, window_params = [{transform_indices = @transform_0, window_bounds = array<i64: 16, 1>}, {pipeline_mode = #tpu.pipeline_mode<synchronous>, transform_indices = @transform_1, window_bounds = array<i64: 128, 128>}, {transform_indices = @transform_2, window_bounds = array<i64: 16, 128>}]} {
    %c0 = arith.constant 0 : index
    %c0_0 = arith.constant 0 : index
    %0 = vector.load %arg1[%c0, %c0_0] : memref<16x1xi32, #tpu.memory_space<vmem>>, vector<16x1xi32>
    %1 = tpu.iota {dimensions = array<i32: 1>} : vector<16x128xi32>
    %2 = vector.broadcast %0 : vector<16x1xi32> to vector<16x128xi32>
    %3 = arith.cmpi eq, %2, %1 : vector<16x128xi32>
    %4 = arith.extui %3 : vector<16x128xi1> to vector<16x128xi32>
    %5 = arith.sitofp %4 : vector<16x128xi32> to vector<16x128xf32>
    %c0_1 = arith.constant 0 : index
    %c0_2 = arith.constant 0 : index
    %6 = vector.load %arg2[%c0_1, %c0_2] : memref<128x128xf32, #tpu.memory_space<vmem>>, vector<128x128xf32>
    %cst = arith.constant dense<0.000000e+00> : vector<16x128xf32>
    %7 = tpu.matmul %5, %6, %cst {dimension_numbers = #tpu.dot_dimension_numbers<[1], [0], [0], [1], [0, 0, 1, 1], [], []>} : vector<16x128xf32>, vector<128x128xf32>, vector<16x128xf32> -> vector<16x128xf32>
    %c0_3 = arith.constant 0 : index
    %c0_4 = arith.constant 0 : index
    %8 = vector.load %arg3[%c0_3, %c0_4] : memref<16x128xf32, #tpu.memory_space<vmem>>, vector<16x128xf32>
    tpu.vector_store %arg3[%c0_3, %c0_4], %7 {strides = array<i32>} : memref<16x128xf32, #tpu.memory_space<vmem>>, vector<16x128xf32>,
    return
  }
  func.func @transform_0(%arg0: i32) -> (i32, i32) {
    %c0_i32 = arith.constant 0 : i32
    %c0_i32_0 = arith.constant 0 : i32
    return %arg0, %c0_i32 : i32, i32
  }
  func.func @transform_1(%arg0: i32) -> (i32, i32) {
    %c0_i32 = arith.constant 0 : i32
    %c0_i32_0 = arith.constant 0 : i32
    %c0_i32_1 = arith.constant 0 : i32
    return %c0_i32, %c0_i32_0 : i32, i32
  }
  func.func @transform_2(%arg0: i32) -> (i32, i32) {
    %c0_i32 = arith.constant 0 : i32
    %c0_i32_0 = arith.constant 0 : i32
    return %arg0, %c0_i32 : i32, i32
  }
}

</mosaic_0001>

<llo_original>
// kernel: tpu_custom_call.1
$region0: #{tpu_custom_call.1}
  #allocation0 [shape = 'u32[]', space=smem, size = 0x4, offset = 0x4, fixed_abs, tag = 'smem constant byte address 0x4 - core index']
  #allocation1 [shape = 'u32[144,128]{1,0:T(1,128)}', space=vmem, size = 0x12000, scoped, tag = 'internal scratch']
  %s0 = inlined_call_operand.vmem [shape: s32[16,1], index: 0, kind: input, shape index: {}]
  %s1 = inlined_call_operand.hbm [shape: f32[128,128], index: 1, kind: input, shape index: {}]
  %s2 = inlined_call_operand.hbm [shape: f32[16,128], index: 2, kind: output, shape index: {}]
  %s3 = sld [smem:[#allocation0]]
  $region22: #{tpu_custom_call.1} parent=0
    _
  %s5 = ssub.s32 1, %s3
  %s6 = scalar_select 0, %s5, %s3
  $region1: #{tpu_custom_call.1} parent=0
    #allocation2 [shape = 'u8[65536]{0}', space=vmem, size = 0x10000, scoped, tag = 'input window, operand 1, single buffered']
    #allocation3 [shape = 's32[1]{0}', space=sflag, size = 0x4, scoped, tag = 'scoped memory for tpu_custom_call.1']
    #allocation4 [shape = 's32[1]{0}', space=sflag, size = 0x4, scoped, tag = 'scoped memory for tpu_custom_call.1']
    #allocation5 [shape = 'u8[8192]{0}', space=vmem, size = 0x2000, scoped, tag = 'output window, operand 0, single buffered']
    %7 = vsyncpa [#allocation3], 0
    %8 = vsyncpa [#allocation4], 0
    // Predicated region
    $region2: #{tpu_custom_call.1} parent=1 // pred_check
      _
    $region3: #{tpu_custom_call.1} parent=1 // pred_check_branch
      %10 = sbr.rel (0) target = $region5
    $region4: #{tpu_custom_call.1} parent=1 // pred_region
      _
    $region5: #{tpu_custom_call.1} parent=1 // pred_fallthru
      _
    // Predicated region
    $region6: #{tpu_custom_call.1} parent=1 // pred_check
      _
    $region7: #{tpu_custom_call.1} parent=1 // pred_check_branch
      %12 = sbr.rel (0) target = $region9
    $region8: #{tpu_custom_call.1} parent=1 // pred_region
      %s14 = ssub.s32 2048, 2048
      %15 = vsyncadd [#allocation3], %s14
      %s16 = sshll.u32 [#allocation2], 4
      %s17 = int_to_ptr.vmem [resolvable:$true] %s16
      %22 = dma.hbm_to_vmem [thread:$0]  %s1, 2048, %s17, [#allocation3], 128, 128, 8
    $region9: #{tpu_custom_call.1} parent=1 // pred_fallthru
      _
    // Predicated region
    $region10: #{tpu_custom_call.1} parent=1 // pred_check
      _
    $region11: #{tpu_custom_call.1} parent=1 // pred_check_branch
      %24 = sbr.rel (0) target = $region13
    $region12: #{tpu_custom_call.1} parent=1 // pred_region
      %25 = dma.done [#allocation3], 2048
    $region13: #{tpu_custom_call.1} parent=1 // pred_fallthru
      _
    %v26 = vld [vmem:[%s0] sm:$0xff]
    %v27 = vld [vmem:[%s0 + $0x8] sm:$0xff]
    %v28 = vlaneseq
    %v29 = vand.u32 %v28, 127
    %30 = vset.pattern.permute.xlu0 0
    %31 = vperm.xlu0 %30, %v26
    %v32 = vpop.permute.xlu0 %31
    %33 = vset.pattern.permute.xlu0 0
    %34 = vperm.xlu0 %33, %v27
    %v35 = vpop.permute.xlu0 %34
    %vm36 = vcmp.eq.s32.totalorder %v32, %v29
    %vm37 = vcmp.eq.s32.totalorder %v35, %v29
    %v38 = vsel %vm36, 1, 0
    %v39 = vsel %vm37, 1, 0
    %v40 = vcvt.s32.f32 %v38
    %v41 = vcvt.s32.f32 %v39
    %v42 = vld [vmem:[#allocation2] sm:$0xff]
    %v43 = vld [vmem:[#allocation2 + $0x8] sm:$0xff]
    %v44 = vld [vmem:[#allocation2 + $0x10] sm:$0xff]
    %v45 = vld [vmem:[#allocation2 + $0x18] sm:$0xff]
    %v46 = vld [vmem:[#allocation2 + $0x20] sm:$0xff]
    %v47 = vld [vmem:[#allocation2 + $0x28] sm:$0xff]
    %v48 = vld [vmem:[#allocation2 + $0x30] sm:$0xff]
    %v49 = vld [vmem:[#allocation2 + $0x38] sm:$0xff]
    %v50 = vld [vmem:[#allocation2 + $0x40] sm:$0xff]
    %v51 = vld [vmem:[#allocation2 + $0x48] sm:$0xff]
    %v52 = vld [vmem:[#allocation2 + $0x50] sm:$0xff]
    %v53 = vld [vmem:[#allocation2 + $0x58] sm:$0xff]
    %v54 = vld [vmem:[#allocation2 + $0x60] sm:$0xff]
    %v55 = vld [vmem:[#allocation2 + $0x68] sm:$0xff]
    %v56 = vld [vmem:[#allocation2 + $0x70] sm:$0xff]
    %v57 = vld [vmem:[#allocation2 + $0x78] sm:$0xff]
    %58 = vmatprep.subr.mxu0 0.0
    %59 = vmatpush1.msra.mxu0 %v57
    %60 = vmatprep.subr.mxu0 0.0
    %61 = vmatpush1.msra.mxu0 %v56
    %62 = vmatprep.subr.mxu0 0.0
    %63 = vmatpush1.msra.mxu0 %v55
    %64 = vmatprep.subr.mxu0 0.0
    %65 = vmatpush1.msra.mxu0 %v54
    %66 = vmatprep.subr.mxu0 0.0
    %67 = vmatpush1.msra.mxu0 %v53
    %68 = vmatprep.subr.mxu0 0.0
    %69 = vmatpush1.msra.mxu0 %v52
    %70 = vmatprep.subr.mxu0 0.0
    %71 = vmatpush1.msra.mxu0 %v51
    %72 = vmatprep.subr.mxu0 0.0
    %73 = vmatpush1.msra.mxu0 %v50
    %74 = vmatprep.subr.mxu0 0.0
    %75 = vmatpush1.msra.mxu0 %v49
    %76 = vmatprep.subr.mxu0 0.0
    %77 = vmatpush1.msra.mxu0 %v48
    %78 = vmatprep.subr.mxu0 0.0
    %79 = vmatpush1.msra.mxu0 %v47
    %80 = vmatprep.subr.mxu0 0.0
    %81 = vmatpush1.msra.mxu0 %v46
    %82 = vmatprep.subr.mxu0 0.0
    %83 = vmatpush1.msra.mxu0 %v45
    %84 = vmatprep.subr.mxu0 0.0
    %85 = vmatpush1.msra.mxu0 %v44
    %86 = vmatprep.subr.mxu0 0.0
    %87 = vmatpush1.msra.mxu0 %v43
    %88 = vmatprep.subr.mxu0 0.0
    %89 = vmatpush1.msra.mxu0 %v42
    %90 = vmatprep.subr.mxu0 0.0
    %91 = vmatpush2.msra.mxu0 0.0
    %92 = vmatprep.subr.mxu0 0.0
    %93 = vmatpush2.msra.mxu0 0.0
    %94 = vmatprep.subr.mxu0 0.0
    %95 = vmatpush2.msra.mxu0 0.0
    %96 = vmatprep.subr.mxu0 0.0
    %97 = vmatpush2.msra.mxu0 0.0
    %98 = vmatprep.subr.mxu0 0.0
    %99 = vmatpush2.msra.mxu0 0.0
    %100 = vmatprep.subr.mxu0 0.0
    %101 = vmatpush2.msra.mxu0 0.0
    %102 = vmatprep.subr.mxu0 0.0
    %103 = vmatpush2.msra.mxu0 0.0
    %104 = vmatprep.subr.mxu0 0.0
    %105 = vmatpush2.msra.mxu0 0.0
    %106 = vmatprep.subr.mxu0 0.0
    %107 = vmatpush2.msra.mxu0 0.0
    %108 = vmatprep.subr.mxu0 0.0
    %109 = vmatpush2.msra.mxu0 0.0
    %110 = vmatprep.subr.mxu0 0.0
    %111 = vmatpush2.msra.mxu0 0.0
    %112 = vmatprep.subr.mxu0 0.0
    %113 = vmatpush2.msra.mxu0 0.0
    %114 = vmatprep.subr.mxu0 0.0
    %115 = vmatpush2.msra.mxu0 0.0
    %116 = vmatprep.subr.mxu0 0.0
    %117 = vmatpush2.msra.mxu0 0.0
    %118 = vmatprep.subr.mxu0 0.0
    %119 = vmatpush2.msra.mxu0 0.0
    %120 = vmatprep.subr.mxu0 0.0
    %121 = vmatpush2.msra.mxu0 0.0
    %122 = vmatprep.mubr.f32.mxu0 0.0
    %123 = vmatmul.mubr.f32.gmra.mxu0 %v40
    %v124 = vpop.f32.mrf.mxu0
    %v125 = vadd.f32 0.0, %v124
    %v126 = vpop.f32.mrf.mxu0
    %127 = vmatprep.mubr.f32.mxu0 0.0
    %128 = vmatmul.mubr.f32.gmra.mxu0 %v41
    %v129 = vpop.f32.mrf.mxu0
    %v130 = vadd.f32 0.0, %v129
    %v131 = vpop.f32.mrf.mxu0
    %132 = vdwg.mxu0
    %133 = vst [vmem:[#allocation5] sm:$0xff] %v125
    %134 = vst [vmem:[#allocation5 + $0x8] sm:$0xff] %v130
    // Predicated region
    $region14: #{tpu_custom_call.1} parent=1 // pred_check
      _
    $region15: #{tpu_custom_call.1} parent=1 // pred_check_branch
      %136 = sbr.rel (0) target = $region17
    $region16: #{tpu_custom_call.1} parent=1 // pred_region
      %s138 = ssub.s32 256, 256
      %139 = vsyncadd [#allocation4], %s138
      %s140 = sshll.u32 [#allocation5], 4
      %s141 = int_to_ptr.vmem [resolvable:$true] %s140
      %146 = dma.vmem_to_hbm [thread:$0]  %s141, 256, %s2, [#allocation4], 128, 128, 8
    $region17: #{tpu_custom_call.1} parent=1 // pred_fallthru
      _
    // Predicated region
    $region18: #{tpu_custom_call.1} parent=1 // pred_check
      _
    $region19: #{tpu_custom_call.1} parent=1 // pred_check_branch
      %148 = sbr.rel (0) target = $region21
    $region20: #{tpu_custom_call.1} parent=1 // pred_region
      %149 = dma.done [#allocation4], 256
    $region21: #{tpu_custom_call.1} parent=1 // pred_fallthru
      _
    %150 = vsyncpa [#allocation3], 1
    %151 = vsyncpa [#allocation4], 1

</llo_original>
